<compile_context>
chip_gen: v5e
topology: v5e:2x2
jax: 0.10.0
libtpu: 0.0.40
codegen_flags: <defaults>
</compile_context>

<pallas_src>
import math

import jax
import jax.numpy as jnp
from jax import lax
from jax.experimental import pallas as pl
from jax.experimental.pallas import tpu as pltpu

# ----------------------------- config -------------------------------------
BATCH = 2
SEQ = 8
HIDDEN = 32
NUM_HEADS = 4
HEAD_DIM = HIDDEN // NUM_HEADS
INTER = 64          # intermediate_size
EPS = 1e-6
NEG_BIG = -1e30     # large-negative causal bias; safe because the diagonal is
                    # never masked (strict col > row), so no row is all-masked.


def _rmsnorm(x, w, eps=EPS):
    # x: (R, H) float32, w: (1, H)
    ms = jnp.mean(x * x, axis=-1, keepdims=True)
    return x * lax.rsqrt(ms + eps) * w


def sandwich_block_kernel(
    x_ref,          # (B, S, H)
    g_ref,          # (4, H) packed RMSNorm weights [g1; g2; g3; g4]
    wqkv_ref,       # (H, 3H) fused q|k|v, (in, out) layout, Q pre-scaled
    wo_ref,         # (H, H)
    w1_ref,         # (H, 2*INTER)
    w2_ref,         # (INTER, H)
    o_ref,          # (B, S, H) output
):
    B, S, H = x_ref.shape
    D = HEAD_DIM
    # Collapse (B, S) into rows for all norms / projections.  (2,8,32)->(16,32)
    # keeps the minor (lane) dim unchanged -> layout no-op.
    x = x_ref[...].astype(jnp.float32).reshape(B * S, H)

    # ---- attention sub-block ------------------------------------------------
    residual = x
    xn = _rmsnorm(x, g_ref[0:1, :])

    # One fused QKV matmul: (16,32) @ (32,96).  The 1/sqrt(D) softmax scale is
    # already folded into the Q columns of wqkv (host-side).
    qkv = jnp.dot(xn, wqkv_ref[...], preferred_element_type=jnp.float32)

    # Causal additive bias, built and broadcast ONCE (hoisted out of head loop).
    row = lax.broadcasted_iota(jnp.int32, (S, S), 0)
    col = lax.broadcasted_iota(jnp.int32, (S, S), 1)
    bias = jnp.where(col > row, NEG_BIG, 0.0).astype(jnp.float32)     # (S, S)
    bias_b = jnp.broadcast_to(bias[None, :, :], (B, S, S))            # (B, S, S)

    # K transposed once to (B, H, S); per-head slices along the sublane dim are
    # 8-aligned, so the per-head score matmul needs no implicit transpose.
    kT = jnp.swapaxes(qkv[:, H:2 * H].reshape(B, S, H), 1, 2)         # (B, H, S)

    head_outs = []
    for h in range(NUM_HEADS):                       # statically unrolled
        lo = h * D
        hi = lo + D
        qh = qkv[:, lo:hi].reshape(B, S, D)                   # (B, S, D)
        vh = qkv[:, 2 * H + lo:2 * H + hi].reshape(B, S, D)   # (B, S, D)
        khT = kT[:, lo:hi, :]                                 # (B, D, S)

        s = jnp.einsum("bqd,bds->bqs", qh, khT,
                       preferred_element_type=jnp.float32) + bias_b
        m = jnp.max(s, axis=-1, keepdims=True)
        p = jnp.exp(s - m)
        p = p / jnp.sum(p, axis=-1, keepdims=True)            # exact softmax
        oh = jnp.einsum("bqk,bkd->bqd", p, vh,
                        preferred_element_type=jnp.float32)   # (B, S, D)
        head_outs.append(oh.reshape(B * S, D))

    # Reassemble heads (4 aligned 8-lane pieces) and do ONE K=32 o_proj matmul.
    attn = jnp.concatenate(head_outs, axis=-1)                # (B*S, H)
    attn_o = jnp.dot(attn, wo_ref[...], preferred_element_type=jnp.float32)

    # sandwich norm after attention
    x2 = _rmsnorm(residual + attn_o, g_ref[1:2, :])

    # ---- MLP sub-block ------------------------------------------------------
    xn3 = _rmsnorm(x2, g_ref[2:3, :])
    gv = jnp.dot(xn3, w1_ref[...], preferred_element_type=jnp.float32)  # (16, 2*I)
    gate = gv[:, :INTER]
    value = gv[:, INTER:]
    mlp = (gate * jax.nn.sigmoid(gate)) * value      # SiLU(gate) * value
    mlp = jnp.dot(mlp, w2_ref[...], preferred_element_type=jnp.float32)
    # dropout(p=0.0) -> identity (eval semantics)

    out = _rmsnorm(x2 + mlp, g_ref[3:4, :])
    o_ref[...] = out.reshape(B, S, H).astype(o_ref.dtype)


def prepare_params(params):
    """One-time host-side weight prep; call ONCE, outside the per-step path."""
    inv_scale = 1.0 / math.sqrt(HEAD_DIM)
    wqkv = jnp.concatenate(
        [params["wq"] * inv_scale, params["wk"], params["wv"]], axis=1)   # (H, 3H)
    gammas = jnp.concatenate(
        [params["g1"], params["g2"], params["g3"], params["g4"]], axis=0)  # (4, H)
    return {
        "gammas": gammas,
        "wqkv": wqkv,
        "wo": params["wo"],
        "w1": params["w1"],
        "w2": params["w2"],
    }


def sandwich_transformer_block(x, prepared):
    B, S, H = x.shape
    assert S == SEQ and H == HIDDEN

    vmem = pl.BlockSpec(memory_space=pltpu.MemorySpace.VMEM)
    # Single program, no grid: every operand is a whole-array VMEM block
    # (total resident footprint ~50 KB, far under VMEM on all generations).
    return pl.pallas_call(
        sandwich_block_kernel,
        out_shape=jax.ShapeDtypeStruct((B, S, H), jnp.float32),
        in_specs=[vmem] * 6,
        out_specs=vmem,
    )(
        x,
        prepared["gammas"],
        prepared["wqkv"],
        prepared["wo"],
        prepared["w1"],
        prepared["w2"],
    )


# --------------------------- pure-JAX reference ----------------------------
def reference_block(x, p):
    def rms(x, w):
        ms = jnp.mean(x.astype(jnp.float32) ** 2, axis=-1, keepdims=True)
        return x * lax.rsqrt(ms + EPS) * w[0]

    B, S, H = x.shape
    residual = x
    xn = rms(x, p["g1"])
    q = xn @ p["wq"]
    k = xn @ p["wk"]
    v = xn @ p["wv"]
    q = q.reshape(B, S, NUM_HEADS, HEAD_DIM).transpose(0, 2, 1, 3)
    k = k.reshape(B, S, NUM_HEADS, HEAD_DIM).transpose(0, 2, 1, 3)
    v = v.reshape(B, S, NUM_HEADS, HEAD_DIM).transpose(0, 2, 1, 3)
    scores = jnp.einsum("bhqd,bhkd->bhqk", q, k) / math.sqrt(HEAD_DIM)
    causal = jnp.triu(jnp.ones((S, S), bool), 1)
    scores = jnp.where(causal[None, None], -jnp.inf, scores)
    attn = jax.nn.softmax(scores, axis=-1)
    out = jnp.einsum("bhqk,bhkd->bhqd", attn, v)
    out = out.transpose(0, 2, 1, 3).reshape(B, S, H) @ p["wo"]
    x2 = rms(residual + out, p["g2"])
    xn3 = rms(x2, p["g3"])
    gv = xn3 @ p["w1"]
    gate, value = gv[..., :INTER], gv[..., INTER:]
    mlp = jax.nn.silu(gate) * value
    mlp = mlp @ p["w2"]
    return rms(x2 + mlp, p["g4"])


if __name__ == "__main__":
    key = jax.random.PRNGKey(0)
    kx, kq, kk, kv, ko, k1, k2 = jax.random.split(key, 7)

    x = jax.random.normal(kx, (BATCH, SEQ, HIDDEN), dtype=jnp.float32)

    scale = 0.05
    params = {
        # RMSNorm weights: torch.ones(dim) at init
        "g1": jnp.ones((1, HIDDEN), jnp.float32),
        "g2": jnp.ones((1, HIDDEN), jnp.float32),
        "g3": jnp.ones((1, HIDDEN), jnp.float32),
        "g4": jnp.ones((1, HIDDEN), jnp.float32),
        # Linear weights stored as (in, out) = W.T
        "wq": scale * jax.random.normal(kq, (HIDDEN, HIDDEN), jnp.float32),
        "wk": scale * jax.random.normal(kk, (HIDDEN, HIDDEN), jnp.float32),
        "wv": scale * jax.random.normal(kv, (HIDDEN, HIDDEN), jnp.float32),
        "wo": scale * jax.random.normal(ko, (HIDDEN, HIDDEN), jnp.float32),
        "w1": scale * jax.random.normal(k1, (HIDDEN, 2 * INTER), jnp.float32),
        "w2": scale * jax.random.normal(k2, (INTER, HIDDEN), jnp.float32),
    }

    prepared = prepare_params(params)          # one-time weight prep
    prepared = jax.block_until_ready(prepared)

    y = sandwich_transformer_block(x, prepared)
    y = jax.block_until_ready(y)

    y_ref = reference_block(x, params)
    # Tight tolerance restored: exact softmax normalization (no approx recip).
    assert jnp.allclose(y, y_ref, atol=1e-4, rtol=1e-4), "mismatch vs reference"

    print("KERNEL_OK")
</pallas_src>

<mosaic_0001>
module attributes {stable_mosaic.version = 11 : i64} {
  func.func @sandwich_block_kernel(%arg0: memref<2x8x32xf32, #tpu.memory_space<vmem>>, %arg1: memref<4x32xf32, #tpu.memory_space<vmem>>, %arg2: memref<32x96xf32, #tpu.memory_space<vmem>>, %arg3: memref<32x32xf32, #tpu.memory_space<vmem>>, %arg4: memref<32x128xf32, #tpu.memory_space<vmem>>, %arg5: memref<64x32xf32, #tpu.memory_space<vmem>>, %arg6: memref<2x8x32xf32, #tpu.memory_space<vmem>>) attributes {dimension_semantics = [], scalar_prefetch = 0 : i64, scratch_operands = 0 : i64, tpu.core_type = #tpu.core_type<tc>} {
    %c0 = arith.constant 0 : index
    %c0_0 = arith.constant 0 : index
    %c0_1 = arith.constant 0 : index
    %0 = vector.load %arg0[%c0, %c0_0, %c0_1] : memref<2x8x32xf32, #tpu.memory_space<vmem>>, vector<2x8x32xf32>
    %1 = vector.shape_cast %0 : vector<2x8x32xf32> to vector<16x32xf32>
    %c0_2 = arith.constant 0 : index
    %c0_3 = arith.constant 0 : index
    %2 = vector.load %arg1[%c0_2, %c0_3] : memref<4x32xf32, #tpu.memory_space<vmem>>, vector<1x32xf32>
    %3 = arith.mulf %1, %1 : vector<16x32xf32>
    %cst = arith.constant dense<0.000000e+00> : vector<16xf32>
    %4 = vector.multi_reduction <add>, %3, %cst [1] : vector<16x32xf32> to vector<16xf32>
    %5 = vector.shape_cast %4 : vector<16xf32> to vector<16x1xf32>
    %cst_4 = arith.constant 3.200000e+01 : f32
    %6 = vector.broadcast %cst_4 : f32 to vector<16x1xf32>
    %7 = arith.divf %5, %6 : vector<16x1xf32>
    %cst_5 = arith.constant 9.99999997E-7 : f32
    %8 = vector.broadcast %cst_5 : f32 to vector<16x1xf32>
    %9 = arith.addf %7, %8 : vector<16x1xf32>
    %10 = math.rsqrt %9 : vector<16x1xf32>
    %11 = vector.broadcast %10 : vector<16x1xf32> to vector<16x32xf32>
    %12 = arith.mulf %1, %11 : vector<16x32xf32>
    %13 = vector.broadcast %2 : vector<1x32xf32> to vector<16x32xf32>
    %14 = arith.mulf %12, %13 : vector<16x32xf32>
    %c0_6 = arith.constant 0 : index
    %c0_7 = arith.constant 0 : index
    %15 = vector.load %arg2[%c0_6, %c0_7] : memref<32x96xf32, #tpu.memory_space<vmem>>, vector<32x96xf32>
    %cst_8 = arith.constant dense<0.000000e+00> : vector<16x96xf32>
    %16 = tpu.matmul %14, %15, %cst_8 {dimension_numbers = #tpu.dot_dimension_numbers<[1], [0], [0], [1], [0, 0, 1, 1], [], []>} : vector<16x32xf32>, vector<32x96xf32>, vector<16x96xf32> -> vector<16x96xf32>
    %17 = tpu.iota {dimensions = array<i32: 0>} : vector<8x8xi32>
    %18 = tpu.iota {dimensions = array<i32: 1>} : vector<8x8xi32>
    %19 = arith.cmpi sgt, %18, %17 : vector<8x8xi32>
    %cst_9 = arith.constant -1.000000e+30 : f32
    %cst_10 = arith.constant 0.000000e+00 : f32
    %20 = vector.broadcast %cst_9 : f32 to vector<8x8xf32>
    %21 = vector.broadcast %cst_10 : f32 to vector<8x8xf32>
    %22 = arith.select %19, %20, %21 : vector<8x8xi1>, vector<8x8xf32>
    %23 = vector.shape_cast %22 : vector<8x8xf32> to vector<1x8x8xf32>
    %24 = vector.shape_cast %23 : vector<1x8x8xf32> to vector<1x8x8xf32>
    %25 = vector.broadcast %24 : vector<1x8x8xf32> to vector<2x8x8xf32>
    %26 = vector.extract_strided_slice %16 {offsets = [0, 32], sizes = [16, 32], strides = [1, 1]} : vector<16x96xf32> to vector<16x32xf32>
    %27 = vector.shape_cast %26 : vector<16x32xf32> to vector<2x8x32xf32>
    %28 = tpu.transpose %27, [0, 2, 1] : vector<2x8x32xf32> -> vector<2x32x8xf32>
    %29 = vector.extract_strided_slice %16 {offsets = [0, 0], sizes = [16, 8], strides = [1, 1]} : vector<16x96xf32> to vector<16x8xf32>
    %30 = vector.shape_cast %29 : vector<16x8xf32> to vector<2x8x8xf32>
    %31 = vector.extract_strided_slice %16 {offsets = [0, 64], sizes = [16, 8], strides = [1, 1]} : vector<16x96xf32> to vector<16x8xf32>
    %32 = vector.shape_cast %31 : vector<16x8xf32> to vector<2x8x8xf32>
    %33 = vector.extract_strided_slice %28 {offsets = [0, 0, 0], sizes = [2, 8, 8], strides = [1, 1, 1]} : vector<2x32x8xf32> to vector<2x8x8xf32>
    "tpu.trace_start"() <{level = 10 : i32, message = "bqd,bds->bqs"}> : () -> ()
    %cst_11 = arith.constant dense<0.000000e+00> : vector<2x8x8xf32>
    %34 = tpu.matmul %30, %33, %cst_11 {dimension_numbers = #tpu.dot_dimension_numbers<[2], [1], [1], [2], [0, 0, 0, 1, 1, 2], [0], [0]>} : vector<2x8x8xf32>, vector<2x8x8xf32>, vector<2x8x8xf32> -> vector<2x8x8xf32>
    "tpu.trace_stop"() : () -> ()
    %35 = arith.addf %34, %25 : vector<2x8x8xf32>
    %cst_12 = arith.constant dense<0xFF800000> : vector<2x8xf32>
    %36 = vector.multi_reduction <maximumf>, %35, %cst_12 [2] : vector<2x8x8xf32> to vector<2x8xf32>
    %37 = vector.shape_cast %36 : vector<2x8xf32> to vector<2x8x1xf32>
    %38 = vector.broadcast %37 : vector<2x8x1xf32> to vector<2x8x8xf32>
    %39 = arith.subf %35, %38 : vector<2x8x8xf32>
    %40 = math.exp %39 : vector<2x8x8xf32>
    %cst_13 = arith.constant dense<0.000000e+00> : vector<2x8xf32>
    %41 = vector.multi_reduction <add>, %40, %cst_13 [2] : vector<2x8x8xf32> to vector<2x8xf32>
    %42 = vector.shape_cast %41 : vector<2x8xf32> to vector<2x8x1xf32>
    %43 = vector.broadcast %42 : vector<2x8x1xf32> to vector<2x8x8xf32>
    %44 = arith.divf %40, %43 : vector<2x8x8xf32>
    "tpu.trace_start"() <{level = 10 : i32, message = "bqk,bkd->bqd"}> : () -> ()
    %cst_14 = arith.constant dense<0.000000e+00> : vector<2x8x8xf32>
    %45 = tpu.matmul %44, %32, %cst_14 {dimension_numbers = #tpu.dot_dimension_numbers<[2], [1], [1], [2], [0, 0, 0, 1, 1, 2], [0], [0]>} : vector<2x8x8xf32>, vector<2x8x8xf32>, vector<2x8x8xf32> -> vector<2x8x8xf32>
    "tpu.trace_stop"() : () -> ()
    %46 = vector.shape_cast %45 : vector<2x8x8xf32> to vector<16x8xf32>
    %47 = vector.extract_strided_slice %16 {offsets = [0, 8], sizes = [16, 8], strides = [1, 1]} : vector<16x96xf32> to vector<16x8xf32>
    %48 = vector.shape_cast %47 : vector<16x8xf32> to vector<2x8x8xf32>
    %49 = vector.extract_strided_slice %16 {offsets = [0, 72], sizes = [16, 8], strides = [1, 1]} : vector<16x96xf32> to vector<16x8xf32>
    %50 = vector.shape_cast %49 : vector<16x8xf32> to vector<2x8x8xf32>
    %51 = vector.extract_strided_slice %28 {offsets = [0, 8, 0], sizes = [2, 8, 8], strides = [1, 1, 1]} : vector<2x32x8xf32> to vector<2x8x8xf32>
    "tpu.trace_start"() <{level = 10 : i32, message = "bqd,bds->bqs"}> : () -> ()
    %cst_15 = arith.constant dense<0.000000e+00> : vector<2x8x8xf32>
    %52 = tpu.matmul %48, %51, %cst_15 {dimension_numbers = #tpu.dot_dimension_numbers<[2], [1], [1], [2], [0, 0, 0, 1, 1, 2], [0], [0]>} : vector<2x8x8xf32>, vector<2x8x8xf32>, vector<2x8x8xf32> -> vector<2x8x8xf32>
    "tpu.trace_stop"() : () -> ()
    %53 = arith.addf %52, %25 : vector<2x8x8xf32>
    %cst_16 = arith.constant dense<0xFF800000> : vector<2x8xf32>
    %54 = vector.multi_reduction <maximumf>, %53, %cst_16 [2] : vector<2x8x8xf32> to vector<2x8xf32>
    %55 = vector.shape_cast %54 : vector<2x8xf32> to vector<2x8x1xf32>
    %56 = vector.broadcast %55 : vector<2x8x1xf32> to vector<2x8x8xf32>
    %57 = arith.subf %53, %56 : vector<2x8x8xf32>
    %58 = math.exp %57 : vector<2x8x8xf32>
    %cst_17 = arith.constant dense<0.000000e+00> : vector<2x8xf32>
    %59 = vector.multi_reduction <add>, %58, %cst_17 [2] : vector<2x8x8xf32> to vector<2x8xf32>
    %60 = vector.shape_cast %59 : vector<2x8xf32> to vector<2x8x1xf32>
    %61 = vector.broadcast %60 : vector<2x8x1xf32> to vector<2x8x8xf32>
    %62 = arith.divf %58, %61 : vector<2x8x8xf32>
    "tpu.trace_start"() <{level = 10 : i32, message = "bqk,bkd->bqd"}> : () -> ()
    %cst_18 = arith.constant dense<0.000000e+00> : vector<2x8x8xf32>
    %63 = tpu.matmul %62, %50, %cst_18 {dimension_numbers = #tpu.dot_dimension_numbers<[2], [1], [1], [2], [0, 0, 0, 1, 1, 2], [0], [0]>} : vector<2x8x8xf32>, vector<2x8x8xf32>, vector<2x8x8xf32> -> vector<2x8x8xf32>
    "tpu.trace_stop"() : () -> ()
    %64 = vector.shape_cast %63 : vector<2x8x8xf32> to vector<16x8xf32>
    %65 = vector.extract_strided_slice %16 {offsets = [0, 16], sizes = [16, 8], strides = [1, 1]} : vector<16x96xf32> to vector<16x8xf32>
    %66 = vector.shape_cast %65 : vector<16x8xf32> to vector<2x8x8xf32>
    %67 = vector.extract_strided_slice %16 {offsets = [0, 80], sizes = [16, 8], strides = [1, 1]} : vector<16x96xf32> to vector<16x8xf32>
    %68 = vector.shape_cast %67 : vector<16x8xf32> to vector<2x8x8xf32>
    %69 = vector.extract_strided_slice %28 {offsets = [0, 16, 0], sizes = [2, 8, 8], strides = [1, 1, 1]} : vector<2x32x8xf32> to vector<2x8x8xf32>
    "tpu.trace_start"() <{level = 10 : i32, message = "bqd,bds->bqs"}> : () -> ()
    %cst_19 = arith.constant dense<0.000000e+00> : vector<2x8x8xf32>
    %70 = tpu.matmul %66, %69, %cst_19 {dimension_numbers = #tpu.dot_dimension_numbers<[2], [1], [1], [2], [0, 0, 0, 1, 1, 2], [0], [0]>} : vector<2x8x8xf32>, vector<2x8x8xf32>, vector<2x8x8xf32> -> vector<2x8x8xf32>
    "tpu.trace_stop"() : () -> ()
    %71 = arith.addf %70, %25 : vector<2x8x8xf32>
    %cst_20 = arith.constant dense<0xFF800000> : vector<2x8xf32>
    %72 = vector.multi_reduction <maximumf>, %71, %cst_20 [2] : vector<2x8x8xf32> to vector<2x8xf32>
    %73 = vector.shape_cast %72 : vector<2x8xf32> to vector<2x8x1xf32>
    %74 = vector.broadcast %73 : vector<2x8x1xf32> to vector<2x8x8xf32>
    %75 = arith.subf %71, %74 : vector<2x8x8xf32>
    %76 = math.exp %75 : vector<2x8x8xf32>
    %cst_21 = arith.constant dense<0.000000e+00> : vector<2x8xf32>
    %77 = vector.multi_reduction <add>, %76, %cst_21 [2] : vector<2x8x8xf32> to vector<2x8xf32>
    %78 = vector.shape_cast %77 : vector<2x8xf32> to vector<2x8x1xf32>
    %79 = vector.broadcast %78 : vector<2x8x1xf32> to vector<2x8x8xf32>
    %80 = arith.divf %76, %79 : vector<2x8x8xf32>
    "tpu.trace_start"() <{level = 10 : i32, message = "bqk,bkd->bqd"}> : () -> ()
    %cst_22 = arith.constant dense<0.000000e+00> : vector<2x8x8xf32>
    %81 = tpu.matmul %80, %68, %cst_22 {dimension_numbers = #tpu.dot_dimension_numbers<[2], [1], [1], [2], [0, 0, 0, 1, 1, 2], [0], [0]>} : vector<2x8x8xf32>, vector<2x8x8xf32>, vector<2x8x8xf32> -> vector<2x8x8xf32>
    "tpu.trace_stop"() : () -> ()
    %82 = vector.shape_cast %81 : vector<2x8x8xf32> to vector<16x8xf32>
    %83 = vector.extract_strided_slice %16 {offsets = [0, 24], sizes = [16, 8], strides = [1, 1]} : vector<16x96xf32> to vector<16x8xf32>
    %84 = vector.shape_cast %83 : vector<16x8xf32> to vector<2x8x8xf32>
    %85 = vector.extract_strided_slice %16 {offsets = [0, 88], sizes = [16, 8], strides = [1, 1]} : vector<16x96xf32> to vector<16x8xf32>
    %86 = vector.shape_cast %85 : vector<16x8xf32> to vector<2x8x8xf32>
    %87 = vector.extract_strided_slice %28 {offsets = [0, 24, 0], sizes = [2, 8, 8], strides = [1, 1, 1]} : vector<2x32x8xf32> to vector<2x8x8xf32>
    "tpu.trace_start"() <{level = 10 : i32, message = "bqd,bds->bqs"}> : () -> ()
    %cst_23 = arith.constant dense<0.000000e+00> : vector<2x8x8xf32>
    %88 = tpu.matmul %84, %87, %cst_23 {dimension_numbers = #tpu.dot_dimension_numbers<[2], [1], [1], [2], [0, 0, 0, 1, 1, 2], [0], [0]>} : vector<2x8x8xf32>, vector<2x8x8xf32>, vector<2x8x8xf32> -> vector<2x8x8xf32>
    "tpu.trace_stop"() : () -> ()
    %89 = arith.addf %88, %25 : vector<2x8x8xf32>
    %cst_24 = arith.constant dense<0xFF800000> : vector<2x8xf32>
    %90 = vector.multi_reduction <maximumf>, %89, %cst_24 [2] : vector<2x8x8xf32> to vector<2x8xf32>
    %91 = vector.shape_cast %90 : vector<2x8xf32> to vector<2x8x1xf32>
    %92 = vector.broadcast %91 : vector<2x8x1xf32> to vector<2x8x8xf32>
    %93 = arith.subf %89, %92 : vector<2x8x8xf32>
    %94 = math.exp %93 : vector<2x8x8xf32>
    %cst_25 = arith.constant dense<0.000000e+00> : vector<2x8xf32>
    %95 = vector.multi_reduction <add>, %94, %cst_25 [2] : vector<2x8x8xf32> to vector<2x8xf32>
    %96 = vector.shape_cast %95 : vector<2x8xf32> to vector<2x8x1xf32>
    %97 = vector.broadcast %96 : vector<2x8x1xf32> to vector<2x8x8xf32>
    %98 = arith.divf %94, %97 : vector<2x8x8xf32>
    "tpu.trace_start"() <{level = 10 : i32, message = "bqk,bkd->bqd"}> : () -> ()
    %cst_26 = arith.constant dense<0.000000e+00> : vector<2x8x8xf32>
    %99 = tpu.matmul %98, %86, %cst_26 {dimension_numbers = #tpu.dot_dimension_numbers<[2], [1], [1], [2], [0, 0, 0, 1, 1, 2], [0], [0]>} : vector<2x8x8xf32>, vector<2x8x8xf32>, vector<2x8x8xf32> -> vector<2x8x8xf32>
    "tpu.trace_stop"() : () -> ()
    %100 = vector.shape_cast %99 : vector<2x8x8xf32> to vector<16x8xf32>
    %101 = tpu.concatenate %46, %64, %82, %100 in 1 : vector<16x8xf32>, vector<16x8xf32>, vector<16x8xf32>, vector<16x8xf32> -> vector<16x32xf32>
    %c0_27 = arith.constant 0 : index
    %c0_28 = arith.constant 0 : index
    %102 = vector.load %arg3[%c0_27, %c0_28] : memref<32x32xf32, #tpu.memory_space<vmem>>, vector<32x32xf32>
    %cst_29 = arith.constant dense<0.000000e+00> : vector<16x32xf32>
    %103 = tpu.matmul %101, %102, %cst_29 {dimension_numbers = #tpu.dot_dimension_numbers<[1], [0], [0], [1], [0, 0, 1, 1], [], []>} : vector<16x32xf32>, vector<32x32xf32>, vector<16x32xf32> -> vector<16x32xf32>
    %104 = arith.addf %1, %103 : vector<16x32xf32>
    %c1 = arith.constant 1 : index
    %c0_30 = arith.constant 0 : index
    %105 = vector.load %arg1[%c1, %c0_30] : memref<4x32xf32, #tpu.memory_space<vmem>>, vector<1x32xf32>
    %106 = arith.mulf %104, %104 : vector<16x32xf32>
    %cst_31 = arith.constant dense<0.000000e+00> : vector<16xf32>
    %107 = vector.multi_reduction <add>, %106, %cst_31 [1] : vector<16x32xf32> to vector<16xf32>
    %108 = vector.shape_cast %107 : vector<16xf32> to vector<16x1xf32>
    %cst_32 = arith.constant 3.200000e+01 : f32
    %109 = vector.broadcast %cst_32 : f32 to vector<16x1xf32>
    %110 = arith.divf %108, %109 : vector<16x1xf32>
    %cst_33 = arith.constant 9.99999997E-7 : f32
    %111 = vector.broadcast %cst_33 : f32 to vector<16x1xf32>
    %112 = arith.addf %110, %111 : vector<16x1xf32>
    %113 = math.rsqrt %112 : vector<16x1xf32>
    %114 = vector.broadcast %113 : vector<16x1xf32> to vector<16x32xf32>
    %115 = arith.mulf %104, %114 : vector<16x32xf32>
    %116 = vector.broadcast %105 : vector<1x32xf32> to vector<16x32xf32>
    %117 = arith.mulf %115, %116 : vector<16x32xf32>
    %c2 = arith.constant 2 : index
    %c0_34 = arith.constant 0 : index
    %118 = vector.load %arg1[%c2, %c0_34] : memref<4x32xf32, #tpu.memory_space<vmem>>, vector<1x32xf32>
    %119 = arith.mulf %117, %117 : vector<16x32xf32>
    %cst_35 = arith.constant dense<0.000000e+00> : vector<16xf32>
    %120 = vector.multi_reduction <add>, %119, %cst_35 [1] : vector<16x32xf32> to vector<16xf32>
    %121 = vector.shape_cast %120 : vector<16xf32> to vector<16x1xf32>
    %cst_36 = arith.constant 3.200000e+01 : f32
    %122 = vector.broadcast %cst_36 : f32 to vector<16x1xf32>
    %123 = arith.divf %121, %122 : vector<16x1xf32>
    %cst_37 = arith.constant 9.99999997E-7 : f32
    %124 = vector.broadcast %cst_37 : f32 to vector<16x1xf32>
    %125 = arith.addf %123, %124 : vector<16x1xf32>
    %126 = math.rsqrt %125 : vector<16x1xf32>
    %127 = vector.broadcast %126 : vector<16x1xf32> to vector<16x32xf32>
    %128 = arith.mulf %117, %127 : vector<16x32xf32>
    %129 = vector.broadcast %118 : vector<1x32xf32> to vector<16x32xf32>
    %130 = arith.mulf %128, %129 : vector<16x32xf32>
    %c0_38 = arith.constant 0 : index
    %c0_39 = arith.constant 0 : index
    %131 = vector.load %arg4[%c0_38, %c0_39] : memref<32x128xf32, #tpu.memory_space<vmem>>, vector<32x128xf32>
    %cst_40 = arith.constant dense<0.000000e+00> : vector<16x128xf32>
    %132 = tpu.matmul %130, %131, %cst_40 {dimension_numbers = #tpu.dot_dimension_numbers<[1], [0], [0], [1], [0, 0, 1, 1], [], []>} : vector<16x32xf32>, vector<32x128xf32>, vector<16x128xf32> -> vector<16x128xf32>
    %133 = vector.extract_strided_slice %132 {offsets = [0, 0], sizes = [16, 64], strides = [1, 1]} : vector<16x128xf32> to vector<16x64xf32>
    %134 = vector.extract_strided_slice %132 {offsets = [0, 64], sizes = [16, 64], strides = [1, 1]} : vector<16x128xf32> to vector<16x64xf32>
    %135 = arith.negf %133 : vector<16x64xf32>
    %136 = math.exp %135 : vector<16x64xf32>
    %cst_41 = arith.constant 1.000000e+00 : f32
    %137 = vector.broadcast %cst_41 : f32 to vector<16x64xf32>
    %138 = arith.addf %137, %136 : vector<16x64xf32>
    %139 = arith.divf %137, %138 : vector<16x64xf32>
    %140 = arith.mulf %133, %139 : vector<16x64xf32>
    %141 = arith.mulf %140, %134 : vector<16x64xf32>
    %c0_42 = arith.constant 0 : index
    %c0_43 = arith.constant 0 : index
    %142 = vector.load %arg5[%c0_42, %c0_43] : memref<64x32xf32, #tpu.memory_space<vmem>>, vector<64x32xf32>
    %cst_44 = arith.constant dense<0.000000e+00> : vector<16x32xf32>
    %143 = tpu.matmul %141, %142, %cst_44 {dimension_numbers = #tpu.dot_dimension_numbers<[1], [0], [0], [1], [0, 0, 1, 1], [], []>} : vector<16x64xf32>, vector<64x32xf32>, vector<16x32xf32> -> vector<16x32xf32>
    %144 = arith.addf %117, %143 : vector<16x32xf32>
    %c3 = arith.constant 3 : index
    %c0_45 = arith.constant 0 : index
    %145 = vector.load %arg1[%c3, %c0_45] : memref<4x32xf32, #tpu.memory_space<vmem>>, vector<1x32xf32>
    %146 = arith.mulf %144, %144 : vector<16x32xf32>
    %cst_46 = arith.constant dense<0.000000e+00> : vector<16xf32>
    %147 = vector.multi_reduction <add>, %146, %cst_46 [1] : vector<16x32xf32> to vector<16xf32>
    %148 = vector.shape_cast %147 : vector<16xf32> to vector<16x1xf32>
    %cst_47 = arith.constant 3.200000e+01 : f32
    %149 = vector.broadcast %cst_47 : f32 to vector<16x1xf32>
    %150 = arith.divf %148, %149 : vector<16x1xf32>
    %cst_48 = arith.constant 9.99999997E-7 : f32
    %151 = vector.broadcast %cst_48 : f32 to vector<16x1xf32>
    %152 = arith.addf %150, %151 : vector<16x1xf32>
    %153 = math.rsqrt %152 : vector<16x1xf32>
    %154 = vector.broadcast %153 : vector<16x1xf32> to vector<16x32xf32>
    %155 = arith.mulf %144, %154 : vector<16x32xf32>
    %156 = vector.broadcast %145 : vector<1x32xf32> to vector<16x32xf32>
    %157 = arith.mulf %155, %156 : vector<16x32xf32>
    %158 = vector.shape_cast %157 : vector<16x32xf32> to vector<2x8x32xf32>
    %c0_49 = arith.constant 0 : index
    %c0_50 = arith.constant 0 : index
    %c0_51 = arith.constant 0 : index
    %159 = vector.load %arg6[%c0_49, %c0_50, %c0_51] : memref<2x8x32xf32, #tpu.memory_space<vmem>>, vector<2x8x32xf32>
    tpu.vector_store %arg6[%c0_49, %c0_50, %c0_51], %158 {strides = array<i32>} : memref<2x8x32xf32, #tpu.memory_space<vmem>>, vector<2x8x32xf32>,
    return
  }
}

</mosaic_0001>

<llo_original>
// kernel: tpu_custom_call.1
$region0: #{tpu_custom_call.1}
  #allocation0 [shape = 'u32[]', space=smem, size = 0x4, offset = 0x4, fixed_abs, tag = 'smem constant byte address 0x4 - core index']
  #allocation1 [shape = 'u32[72,128]{1,0:T(1,128)}', space=vmem, size = 0x9000, scoped, tag = 'internal scratch']
  %s0 = inlined_call_operand.hbm [shape: f32[2,8,32], index: 0, kind: input, shape index: {}]
  %s1 = inlined_call_operand.hbm [shape: f32[4,32], index: 1, kind: input, shape index: {}]
  %s2 = inlined_call_operand.vmem [shape: f32[32,96], index: 2, kind: input, shape index: {}]
  %s3 = inlined_call_operand.vmem [shape: f32[32,32], index: 3, kind: input, shape index: {}]
  %s4 = inlined_call_operand.vmem [shape: f32[32,128], index: 4, kind: input, shape index: {}]
  %s5 = inlined_call_operand.vmem [shape: f32[64,32], index: 5, kind: input, shape index: {}]
  %s6 = inlined_call_operand.hbm [shape: f32[2,8,32], index: 6, kind: output, shape index: {}]
  %s7 = sld [smem:[#allocation0]]
  $region42: #{tpu_custom_call.1} parent=0
    _
  %s9 = ssub.s32 1, %s7
  %s10 = scalar_select 0, %s9, %s7
  $region1: #{tpu_custom_call.1} parent=0
    #allocation2 [shape = 'u8[8192]{0}', space=vmem, size = 0x2000, scoped, tag = 'input window, operand 0, single buffered']
    #allocation3 [shape = 's32[1]{0}', space=sflag, size = 0x4, scoped, tag = 'scoped memory for tpu_custom_call.1']
    #allocation4 [shape = 's32[1]{0}', space=sflag, size = 0x4, scoped, tag = 'scoped memory for tpu_custom_call.1']
    #allocation5 [shape = 'u8[2048]{0}', space=vmem, size = 0x800, scoped, tag = 'input window, operand 1, single buffered']
    #allocation6 [shape = 's32[1]{0}', space=sflag, size = 0x4, scoped, tag = 'scoped memory for tpu_custom_call.1']
    #allocation7 [shape = 'u8[8192]{0}', space=vmem, size = 0x2000, scoped, tag = 'output window, operand 0, single buffered']
    %11 = vsyncpa [#allocation3], 0
    %12 = vsyncpa [#allocation6], 0
    %13 = vsyncpa [#allocation4], 0
    // Predicated region
    $region2: #{tpu_custom_call.1} parent=1 // pred_check
      _
    $region3: #{tpu_custom_call.1} parent=1 // pred_check_branch
      %15 = sbr.rel (0) target = $region5
    $region4: #{tpu_custom_call.1} parent=1 // pred_region
      %17 = vsyncadd [#allocation3], 0
      %s18 = sshll.u32 %s0, 4
      %s19 = int_to_ptr.hbm [resolvable:$true] %s18
      %s20 = sshll.u32 [#allocation2], 4
      %s21 = int_to_ptr.vmem [resolvable:$true] %s20
      %26 = dma.hbm_to_vmem [thread:$0]  %s19, 256, %s21, [#allocation3], 128, 128, 8
    $region5: #{tpu_custom_call.1} parent=1 // pred_fallthru
      _
    // Predicated region
    $region6: #{tpu_custom_call.1} parent=1 // pred_check
      _
    $region7: #{tpu_custom_call.1} parent=1 // pred_check_branch
      %28 = sbr.rel (0) target = $region9
    $region8: #{tpu_custom_call.1} parent=1 // pred_region
      %30 = vsyncadd [#allocation6], 0
      %s32 = sshll.u32 %s1, 4
      %s33 = int_to_ptr.hbm [resolvable:$true] %s32
      %s34 = sshll.u32 [#allocation5], 4
      %s35 = int_to_ptr.vmem [resolvable:$true] %s34
      %37 = dma.hbm_to_vmem [thread:$0]  %s33, 64, %s35, [#allocation6]
    $region9: #{tpu_custom_call.1} parent=1 // pred_fallthru
      _
    // Predicated region
    $region10: #{tpu_custom_call.1} parent=1 // pred_check
      _
    $region11: #{tpu_custom_call.1} parent=1 // pred_check_branch
      %39 = sbr.rel (0) target = $region13
    $region12: #{tpu_custom_call.1} parent=1 // pred_region
      _
    $region13: #{tpu_custom_call.1} parent=1 // pred_fallthru
      _
    // Predicated region
    $region14: #{tpu_custom_call.1} parent=1 // pred_check
      _
    $region15: #{tpu_custom_call.1} parent=1 // pred_check_branch
      %41 = sbr.rel (0) target = $region17
    $region16: #{tpu_custom_call.1} parent=1 // pred_region
      _
    $region17: #{tpu_custom_call.1} parent=1 // pred_fallthru
      _
    // Predicated region
    $region18: #{tpu_custom_call.1} parent=1 // pred_check
      _
    $region19: #{tpu_custom_call.1} parent=1 // pred_check_branch
      %43 = sbr.rel (0) target = $region21
    $region20: #{tpu_custom_call.1} parent=1 // pred_region
      _
    $region21: #{tpu_custom_call.1} parent=1 // pred_fallthru
      _
    // Predicated region
    $region22: #{tpu_custom_call.1} parent=1 // pred_check
      _
    $region23: #{tpu_custom_call.1} parent=1 // pred_check_branch
      %45 = sbr.rel (0) target = $region25
    $region24: #{tpu_custom_call.1} parent=1 // pred_region
      _
    $region25: #{tpu_custom_call.1} parent=1 // pred_fallthru
      _
    // Predicated region
    $region26: #{tpu_custom_call.1} parent=1 // pred_check
      _
    $region27: #{tpu_custom_call.1} parent=1 // pred_check_branch
      %47 = sbr.rel (0) target = $region29
    $region28: #{tpu_custom_call.1} parent=1 // pred_region
      %49 = dma.done [#allocation3], 256
    $region29: #{tpu_custom_call.1} parent=1 // pred_fallthru
      _
    // Predicated region
    $region30: #{tpu_custom_call.1} parent=1 // pred_check
      _
    $region31: #{tpu_custom_call.1} parent=1 // pred_check_branch
      %51 = sbr.rel (0) target = $region33
    $region32: #{tpu_custom_call.1} parent=1 // pred_region
      %53 = dma.done [#allocation6], 64
    $region33: #{tpu_custom_call.1} parent=1 // pred_fallthru
      _
    %v54 = vld [vmem:[#allocation2] sm:$0xff]
    %v55 = vld [vmem:[#allocation2 + $0x8] sm:$0xff]
    %v56 = vld [vmem:[#allocation5] sm:$0x1]
    %v57 = vmul.f32 %v54, %v54
    %v58 = vmul.f32 %v55, %v55
    %vm59 = vcmask 261120
    %v60 = vsel %vm59, %v57, 0.0
    %61 = vadd.xlane.f32.xlu0 %v60
    %v62 = vpop.xlane.xlu0 %61
    %v63 = vsel %vm59, %v58, 0.0
    %64 = vadd.xlane.f32.xlu0 %v63
    %v65 = vpop.xlane.xlu0 %64
    %v66 = vrcp.pop 32.0
    %v67 = vmul.f32 32.0, %v66
    %v68 = vsub.f32 1.0, %v67
    %v69 = vmul.f32 %v66, %v68
    %v70 = vadd.f32 %v66, %v69
    %vm71 = vweird.f32 %v66
    %v72 = vsel %vm71, %v66, %v70
    %v73 = vmul.f32 %v62, %v72
    %v74 = vmul.f32 %v65, %v72
    %v75 = vadd.f32 %v73, 1e-06
    %v76 = vadd.f32 %v74, 1e-06
    %v77 = vrsqrt.pop %v75
    %v78 = vmul.f32 %v77, %v75
    %v79 = vmul.f32 %v78, %v77
    %v80 = vmul.f32 0.5, %v79
    %v81 = vsub.f32 1.5, %v80
    %v82 = vmul.f32 %v77, %v81
    %vm83 = vweird.f32 %v75
    %vm84 = vweird.f32 %v77
    %vm85 = vmor %vm83, %vm84
    %v86 = vsel %vm85, %v77, %v82
    %v87 = vrsqrt.pop %v76
    %v88 = vmul.f32 %v87, %v76
    %v89 = vmul.f32 %v88, %v87
    %v90 = vmul.f32 0.5, %v89
    %v91 = vsub.f32 1.5, %v90
    %v92 = vmul.f32 %v87, %v91
    %vm93 = vweird.f32 %v76
    %vm94 = vweird.f32 %v87
    %vm95 = vmor %vm93, %vm94
    %v96 = vsel %vm95, %v87, %v92
    %v97 = vmul.f32 %v54, %v86
    %v98 = vmul.f32 %v55, %v96
    %v99 = vperm.slane %v56, 0
    %v100 = vmul.f32 %v97, %v99
    %v101 = vmul.f32 %v98, %v99
    %v102 = vld [vmem:[%s2] sm:$0xff]
    %v103 = vld [vmem:[%s2 + $0x8] sm:$0xff]
    %v104 = vld [vmem:[%s2 + $0x10] sm:$0xff]
    %v105 = vld [vmem:[%s2 + $0x18] sm:$0xff]
    %v107 = vsel %vm59, %v100, 0
    %v110 = vsel %vm59, %v101, 0
    %112 = vmatpush.msra.mxu0 0.0
    %113 = vmatpush.msra.mxu0 0.0
    %114 = vmatpush.msra.mxu0 0.0
    %115 = vmatpush.msra.mxu0 0.0
    %116 = vmatpush.msra.mxu0 0.0
    %117 = vmatpush.msra.mxu0 0.0
    %118 = vmatpush.msra.mxu0 0.0
    %119 = vmatpush.msra.mxu0 0.0
    %120 = vmatpush.msra.mxu0 0.0
    %121 = vmatpush.msra.mxu0 0.0
    %122 = vmatpush.msra.mxu0 0.0
    %123 = vmatpush.msra.mxu0 0.0
    %124 = vmatpush.msra.mxu0 %v105
    %125 = vmatpush.msra.mxu0 %v104
    %126 = vmatpush.msra.mxu0 %v103
    %127 = vmatpush.msra.mxu0 %v102
    %128 = vmatmul.f32.gmra.mxu0 %v107
    %v129 = vpop.f32.mrf.mxu0
    %v130 = vadd.f32 0.0, %v129
    %131 = vmatmul.f32.gmra.mxu0 %v110
    %v132 = vpop.f32.mrf.mxu0
    %v133 = vadd.f32 0.0, %v132
    %134 = vdwg.mxu0
    %v135 = vlaneseq
    %v136 = vshrl.u32 %v135, 7
    %v137 = vlaneseq
    %v138 = vand.u32 %v137, 127
    %vm139 = vcmp.gt.s32.totalorder %v138, %v136
    %v140 = vsel %vm139, -1e+30, 0.0
    %142 = vrot.lane.b32.xlu0 %v130, 96
    %v143 = vpop.permute.xlu0 %142
    %vm144 = vcmask 64512
    %v145 = vsel %vm144, %v130, 0
    %v147 = vsel %vm144, %v143, 0
    %149 = vmatpush.xpose.msra.mxu0 0.0
    %150 = vmatpush.xpose.msra.mxu0 0.0
    %151 = vmatpush.xpose.msra.mxu0 0.0
    %152 = vmatpush.xpose.msra.mxu0 0.0
    %153 = vmatpush.xpose.msra.mxu0 0.0
    %154 = vmatpush.xpose.msra.mxu0 0.0
    %155 = vmatpush.xpose.msra.mxu0 0.0
    %156 = vmatpush.xpose.msra.mxu0 0.0
    %157 = vmatpush.xpose.msra.mxu0 0.0
    %158 = vmatpush.xpose.msra.mxu0 0.0
    %159 = vmatpush.xpose.msra.mxu0 0.0
    %160 = vmatpush.xpose.msra.mxu0 0.0
    %161 = vmatpush.xpose.msra.mxu0 0.0
    %162 = vmatpush.xpose.msra.mxu0 0.0
    %163 = vmatpush.xpose.msra.mxu0 0.0
    %164 = vmatpush.xpose.msra.mxu0 %v147
    %165 = vmatmul.f32.gmra.mxu0 %v145
    %v166 = vpop.f32.mrf.mxu0
    %v167 = vadd.f32 %v140, %v166
    %168 = vdwg.mxu0
    %170 = vrot.lane.b32.xlu0 %v133, 96
    %v171 = vpop.permute.xlu0 %170
    %v172 = vsel %vm144, %v133, 0
    %v174 = vsel %vm144, %v171, 0
    %176 = vmatpush.xpose.msra.mxu0 0.0
    %177 = vmatpush.xpose.msra.mxu0 0.0
    %178 = vmatpush.xpose.msra.mxu0 0.0
    %179 = vmatpush.xpose.msra.mxu0 0.0
    %180 = vmatpush.xpose.msra.mxu0 0.0
    %181 = vmatpush.xpose.msra.mxu0 0.0
    %182 = vmatpush.xpose.msra.mxu0 0.0
    %183 = vmatpush.xpose.msra.mxu0 0.0
    %184 = vmatpush.xpose.msra.mxu0 0.0
    %185 = vmatpush.xpose.msra.mxu0 0.0
    %186 = vmatpush.xpose.msra.mxu0 0.0
    %187 = vmatpush.xpose.msra.mxu0 0.0
    %188 = vmatpush.xpose.msra.mxu0 0.0
    %189 = vmatpush.xpose.msra.mxu0 0.0
    %190 = vmatpush.xpose.msra.mxu0 0.0
    %191 = vmatpush.xpose.msra.mxu0 %v174
    %192 = vmatmul.f32.gmra.mxu0 %v172
    %v193 = vpop.f32.mrf.mxu0
    %v194 = vadd.f32 %v140, %v193
    %195 = vdwg.mxu0
    %v196 = vsel %vm144, %v167, -inf
    %197 = vmax.xlane.f32.xlu0 %v196
    %v198 = vpop.xlane.xlu0 %197
    %v199 = vsel %vm144, %v194, -inf
    %200 = vmax.xlane.f32.xlu0 %v199
    %v201 = vpop.xlane.xlu0 %200
    %v202 = vsub.f32 %v167, %v198
    %v203 = vsub.f32 %v194, %v201
    %v204 = vmul.f32 %v202, 1.442695
    %v205 = vpow.pop %v204
    %v206 = vmul.f32 %v203, 1.442695
    %v207 = vpow.pop %v206
    %v208 = vsel %vm144, %v205, 0.0
    %209 = vadd.xlane.f32.xlu0 %v208
    %v210 = vpop.xlane.xlu0 %209
    %v211 = vsel %vm144, %v207, 0.0
    %212 = vadd.xlane.f32.xlu0 %v211
    %v213 = vpop.xlane.xlu0 %212
    %v214 = vrcp.pop %v210
    %v215 = vmul.f32 %v210, %v214
    %v216 = vsub.f32 1.0, %v215
    %v217 = vmul.f32 %v214, %v216
    %v218 = vadd.f32 %v214, %v217
    %vm219 = vweird.f32 %v210
    %vm220 = vweird.f32 %v214
    %vm221 = vmor %vm219, %vm220
    %v222 = vsel %vm221, %v214, %v218
    %v223 = vand.u32 2147483647, %v210
    %vm224 = vcmp.eq.f32.partialorder %v223, 8.507059e+37
    %v225 = vand.u32 %v210, 2147483648
    %v226 = vor.u32 1.1754944e-38, %v225
    %v227 = vsel %vm224, %v226, %v222
    %v228 = vmul.f32 %v205, %v227
    %v229 = vrcp.pop %v213
    %v230 = vmul.f32 %v213, %v229
    %v231 = vsub.f32 1.0, %v230
    %v232 = vmul.f32 %v229, %v231
    %v233 = vadd.f32 %v229, %v232
    %vm234 = vweird.f32 %v213
    %vm235 = vweird.f32 %v229
    %vm236 = vmor %vm234, %vm235
    %v237 = vsel %vm236, %v229, %v233
    %v238 = vand.u32 2147483647, %v213
    %vm239 = vcmp.eq.f32.partialorder %v238, 8.507059e+37
    %v240 = vand.u32 %v213, 2147483648
    %v241 = vor.u32 1.1754944e-38, %v240
    %v242 = vsel %vm239, %v241, %v237
    %v243 = vmul.f32 %v207, %v242
    %244 = vrot.lane.b32.xlu0 %v130, 64
    %v245 = vpop.permute.xlu0 %244
    %v248 = vsel %vm144, %v228, 0
    %250 = vmatpush.msra.mxu0 0.0
    %251 = vmatpush.msra.mxu0 0.0
    %252 = vmatpush.msra.mxu0 0.0
    %253 = vmatpush.msra.mxu0 0.0
    %254 = vmatpush.msra.mxu0 0.0
    %255 = vmatpush.msra.mxu0 0.0
    %256 = vmatpush.msra.mxu0 0.0
    %257 = vmatpush.msra.mxu0 0.0
    %258 = vmatpush.msra.mxu0 0.0
    %259 = vmatpush.msra.mxu0 0.0
    %260 = vmatpush.msra.mxu0 0.0
    %261 = vmatpush.msra.mxu0 0.0
    %262 = vmatpush.msra.mxu0 0.0
    %263 = vmatpush.msra.mxu0 0.0
    %264 = vmatpush.msra.mxu0 0.0
    %265 = vmatpush.msra.mxu0 %v245
    %266 = vmatmul.f32.gmra.mxu0 %v248
    %v267 = vpop.f32.mrf.mxu0
    %v268 = vadd.f32 0.0, %v267
    %269 = vdwg.mxu0
    %270 = vrot.lane.b32.xlu0 %v133, 64
    %v271 = vpop.permute.xlu0 %270
    %v274 = vsel %vm144, %v243, 0
    %276 = vmatpush.msra.mxu0 0.0
    %277 = vmatpush.msra.mxu0 0.0
    %278 = vmatpush.msra.mxu0 0.0
    %279 = vmatpush.msra.mxu0 0.0
    %280 = vmatpush.msra.mxu0 0.0
    %281 = vmatpush.msra.mxu0 0.0
    %282 = vmatpush.msra.mxu0 0.0
    %283 = vmatpush.msra.mxu0 0.0
    %284 = vmatpush.msra.mxu0 0.0
    %285 = vmatpush.msra.mxu0 0.0
    %286 = vmatpush.msra.mxu0 0.0
    %287 = vmatpush.msra.mxu0 0.0
    %288 = vmatpush.msra.mxu0 0.0
    %289 = vmatpush.msra.mxu0 0.0
    %290 = vmatpush.msra.mxu0 0.0
    %291 = vmatpush.msra.mxu0 %v271
    %292 = vmatmul.f32.gmra.mxu0 %v274
    %v293 = vpop.f32.mrf.mxu0
    %v294 = vadd.f32 0.0, %v293
    %295 = vdwg.mxu0
    %296 = vrot.lane.b32.xlu0 %v130, 120
    %v297 = vpop.permute.xlu0 %296
    %298 = vrot.lane.b32.xlu0 %v130, 88
    %v299 = vpop.permute.xlu0 %298
    %v300 = vsel %vm144, %v297, 0
    %v302 = vsel %vm144, %v299, 0
    %304 = vmatpush.xpose.msra.mxu0 0.0
    %305 = vmatpush.xpose.msra.mxu0 0.0
    %306 = vmatpush.xpose.msra.mxu0 0.0
    %307 = vmatpush.xpose.msra.mxu0 0.0
    %308 = vmatpush.xpose.msra.mxu0 0.0
    %309 = vmatpush.xpose.msra.mxu0 0.0
    %310 = vmatpush.xpose.msra.mxu0 0.0
    %311 = vmatpush.xpose.msra.mxu0 0.0
    %312 = vmatpush.xpose.msra.mxu0 0.0
    %313 = vmatpush.xpose.msra.mxu0 0.0
    %314 = vmatpush.xpose.msra.mxu0 0.0
    %315 = vmatpush.xpose.msra.mxu0 0.0
    %316 = vmatpush.xpose.msra.mxu0 0.0
    %317 = vmatpush.xpose.msra.mxu0 0.0
    %318 = vmatpush.xpose.msra.mxu0 0.0
    %319 = vmatpush.xpose.msra.mxu0 %v302
    %320 = vmatmul.f32.gmra.mxu0 %v300
    %v321 = vpop.f32.mrf.mxu0
    %v322 = vadd.f32 %v140, %v321
    %323 = vdwg.mxu0
    %324 = vrot.lane.b32.xlu0 %v133, 120
    %v325 = vpop.permute.xlu0 %324
    %326 = vrot.lane.b32.xlu0 %v133, 88
    %v327 = vpop.permute.xlu0 %326
    %v328 = vsel %vm144, %v325, 0
    %v330 = vsel %vm144, %v327, 0
    %332 = vmatpush.xpose.msra.mxu0 0.0
    %333 = vmatpush.xpose.msra.mxu0 0.0
    %334 = vmatpush.xpose.msra.mxu0 0.0
    %335 = vmatpush.xpose.msra.mxu0 0.0
    %336 = vmatpush.xpose.msra.mxu0 0.0
    %337 = vmatpush.xpose.msra.mxu0 0.0
    %338 = vmatpush.xpose.msra.mxu0 0.0
    %339 = vmatpush.xpose.msra.mxu0 0.0
    %340 = vmatpush.xpose.msra.mxu0 0.0
    %341 = vmatpush.xpose.msra.mxu0 0.0
    %342 = vmatpush.xpose.msra.mxu0 0.0
    %343 = vmatpush.xpose.msra.mxu0 0.0
    %344 = vmatpush.xpose.msra.mxu0 0.0
    %345 = vmatpush.xpose.msra.mxu0 0.0
    %346 = vmatpush.xpose.msra.mxu0 0.0
    %347 = vmatpush.xpose.msra.mxu0 %v330
    %348 = vmatmul.f32.gmra.mxu0 %v328
    %v349 = vpop.f32.mrf.mxu0
    %v350 = vadd.f32 %v140, %v349
    %351 = vdwg.mxu0
    %v352 = vsel %vm144, %v322, -inf
    %353 = vmax.xlane.f32.xlu0 %v352
    %v354 = vpop.xlane.xlu0 %353
    %v355 = vsel %vm144, %v350, -inf
    %356 = vmax.xlane.f32.xlu0 %v355
    %v357 = vpop.xlane.xlu0 %356
    %v358 = vsub.f32 %v322, %v354
    %v359 = vsub.f32 %v350, %v357
    %v360 = vmul.f32 %v358, 1.442695
    %v361 = vpow.pop %v360
    %v362 = vmul.f32 %v359, 1.442695
    %v363 = vpow.pop %v362
    %v364 = vsel %vm144, %v361, 0.0
    %365 = vadd.xlane.f32.xlu0 %v364
    %v366 = vpop.xlane.xlu0 %365
    %v367 = vsel %vm144, %v363, 0.0
    %368 = vadd.xlane.f32.xlu0 %v367
    %v369 = vpop.xlane.xlu0 %368
    %v370 = vrcp.pop %v366
    %v371 = vmul.f32 %v366, %v370
    %v372 = vsub.f32 1.0, %v371
    %v373 = vmul.f32 %v370, %v372
    %v374 = vadd.f32 %v370, %v373
    %vm375 = vweird.f32 %v366
    %vm376 = vweird.f32 %v370
    %vm377 = vmor %vm375, %vm376
    %v378 = vsel %vm377, %v370, %v374
    %v379 = vand.u32 2147483647, %v366
    %vm380 = vcmp.eq.f32.partialorder %v379, 8.507059e+37
    %v381 = vand.u32 %v366, 2147483648
    %v382 = vor.u32 1.1754944e-38, %v381
    %v383 = vsel %vm380, %v382, %v378
    %v384 = vmul.f32 %v361, %v383
    %v385 = vrcp.pop %v369
    %v386 = vmul.f32 %v369, %v385
    %v387 = vsub.f32 1.0, %v386
    %v388 = vmul.f32 %v385, %v387
    %v389 = vadd.f32 %v385, %v388
    %vm390 = vweird.f32 %v369
    %vm391 = vweird.f32 %v385
    %vm392 = vmor %vm390, %vm391
    %v393 = vsel %vm392, %v385, %v389
    %v394 = vand.u32 2147483647, %v369
    %vm395 = vcmp.eq.f32.partialorder %v394, 8.507059e+37
    %v396 = vand.u32 %v369, 2147483648
    %v397 = vor.u32 1.1754944e-38, %v396
    %v398 = vsel %vm395, %v397, %v393
    %v399 = vmul.f32 %v363, %v398
    %400 = vrot.lane.b32.xlu0 %v130, 56
    %v401 = vpop.permute.xlu0 %400
    %v404 = vsel %vm144, %v384, 0
    %406 = vmatpush.msra.mxu0 0.0
    %407 = vmatpush.msra.mxu0 0.0
    %408 = vmatpush.msra.mxu0 0.0
    %409 = vmatpush.msra.mxu0 0.0
    %410 = vmatpush.msra.mxu0 0.0
    %411 = vmatpush.msra.mxu0 0.0
    %412 = vmatpush.msra.mxu0 0.0
    %413 = vmatpush.msra.mxu0 0.0
    %414 = vmatpush.msra.mxu0 0.0
    %415 = vmatpush.msra.mxu0 0.0
    %416 = vmatpush.msra.mxu0 0.0
    %417 = vmatpush.msra.mxu0 0.0
    %418 = vmatpush.msra.mxu0 0.0
    %419 = vmatpush.msra.mxu0 0.0
    %420 = vmatpush.msra.mxu0 0.0
    %421 = vmatpush.msra.mxu0 %v401
    %422 = vmatmul.f32.gmra.mxu0 %v404
    %v423 = vpop.f32.mrf.mxu0
    %v424 = vadd.f32 0.0, %v423
    %425 = vdwg.mxu0
    %426 = vrot.lane.b32.xlu0 %v133, 56
    %v427 = vpop.permute.xlu0 %426
    %v430 = vsel %vm144, %v399, 0
    %432 = vmatpush.msra.mxu0 0.0
    %433 = vmatpush.msra.mxu0 0.0
    %434 = vmatpush.msra.mxu0 0.0
    %435 = vmatpush.msra.mxu0 0.0
    %436 = vmatpush.msra.mxu0 0.0
    %437 = vmatpush.msra.mxu0 0.0
    %438 = vmatpush.msra.mxu0 0.0
    %439 = vmatpush.msra.mxu0 0.0
    %440 = vmatpush.msra.mxu0 0.0
    %441 = vmatpush.msra.mxu0 0.0
    %442 = vmatpush.msra.mxu0 0.0
    %443 = vmatpush.msra.mxu0 0.0
    %444 = vmatpush.msra.mxu0 0.0
    %445 = vmatpush.msra.mxu0 0.0
    %446 = vmatpush.msra.mxu0 0.0
    %447 = vmatpush.msra.mxu0 %v427
    %448 = vmatmul.f32.gmra.mxu0 %v430
    %v449 = vpop.f32.mrf.mxu0
    %v450 = vadd.f32 0.0, %v449
    %451 = vdwg.mxu0
    %452 = vrot.lane.b32.xlu0 %v130, 112
    %v453 = vpop.permute.xlu0 %452
    %454 = vrot.lane.b32.xlu0 %v130, 80
    %v455 = vpop.permute.xlu0 %454
    %v456 = vsel %vm144, %v453, 0
    %v458 = vsel %vm144, %v455, 0
    %460 = vmatpush.xpose.msra.mxu0 0.0
    %461 = vmatpush.xpose.msra.mxu0 0.0
    %462 = vmatpush.xpose.msra.mxu0 0.0
    %463 = vmatpush.xpose.msra.mxu0 0.0
    %464 = vmatpush.xpose.msra.mxu0 0.0
    %465 = vmatpush.xpose.msra.mxu0 0.0
    %466 = vmatpush.xpose.msra.mxu0 0.0
    %467 = vmatpush.xpose.msra.mxu0 0.0
    %468 = vmatpush.xpose.msra.mxu0 0.0
    %469 = vmatpush.xpose.msra.mxu0 0.0
    %470 = vmatpush.xpose.msra.mxu0 0.0
    %471 = vmatpush.xpose.msra.mxu0 0.0
    %472 = vmatpush.xpose.msra.mxu0 0.0
    %473 = vmatpush.xpose.msra.mxu0 0.0
    %474 = vmatpush.xpose.msra.mxu0 0.0
    %475 = vmatpush.xpose.msra.mxu0 %v458
    %476 = vmatmul.f32.gmra.mxu0 %v456
    %v477 = vpop.f32.mrf.mxu0
    %v478 = vadd.f32 %v140, %v477
    %479 = vdwg.mxu0
    %480 = vrot.lane.b32.xlu0 %v133, 112
    %v481 = vpop.permute.xlu0 %480
    %482 = vrot.lane.b32.xlu0 %v133, 80
    %v483 = vpop.permute.xlu0 %482
    %v484 = vsel %vm144, %v481, 0
    %v486 = vsel %vm144, %v483, 0
    %488 = vmatpush.xpose.msra.mxu0 0.0
    %489 = vmatpush.xpose.msra.mxu0 0.0
    %490 = vmatpush.xpose.msra.mxu0 0.0
    %491 = vmatpush.xpose.msra.mxu0 0.0
    %492 = vmatpush.xpose.msra.mxu0 0.0
    %493 = vmatpush.xpose.msra.mxu0 0.0
    %494 = vmatpush.xpose.msra.mxu0 0.0
    %495 = vmatpush.xpose.msra.mxu0 0.0
    %496 = vmatpush.xpose.msra.mxu0 0.0
    %497 = vmatpush.xpose.msra.mxu0 0.0
    %498 = vmatpush.xpose.msra.mxu0 0.0
    %499 = vmatpush.xpose.msra.mxu0 0.0
    %500 = vmatpush.xpose.msra.mxu0 0.0
    %501 = vmatpush.xpose.msra.mxu0 0.0
    %502 = vmatpush.xpose.msra.mxu0 0.0
    %503 = vmatpush.xpose.msra.mxu0 %v486
    %504 = vmatmul.f32.gmra.mxu0 %v484
    %v505 = vpop.f32.mrf.mxu0
    %v506 = vadd.f32 %v140, %v505
    %507 = vdwg.mxu0
    %v508 = vsel %vm144, %v478, -inf
    %509 = vmax.xlane.f32.xlu0 %v508
    %v510 = vpop.xlane.xlu0 %509
    %v511 = vsel %vm144, %v506, -inf
    %512 = vmax.xlane.f32.xlu0 %v511
    %v513 = vpop.xlane.xlu0 %512
    %v514 = vsub.f32 %v478, %v510
    %v515 = vsub.f32 %v506, %v513
    %v516 = vmul.f32 %v514, 1.442695
    %v517 = vpow.pop %v516
    %v518 = vmul.f32 %v515, 1.442695
    %v519 = vpow.pop %v518
    %v520 = vsel %vm144, %v517, 0.0
    %521 = vadd.xlane.f32.xlu0 %v520
    %v522 = vpop.xlane.xlu0 %521
    %v523 = vsel %vm144, %v519, 0.0
    %524 = vadd.xlane.f32.xlu0 %v523
    %v525 = vpop.xlane.xlu0 %524
    %v526 = vrcp.pop %v522
    %v527 = vmul.f32 %v522, %v526
    %v528 = vsub.f32 1.0, %v527
    %v529 = vmul.f32 %v526, %v528
    %v530 = vadd.f32 %v526, %v529
    %vm531 = vweird.f32 %v522
    %vm532 = vweird.f32 %v526
    %vm533 = vmor %vm531, %vm532
    %v534 = vsel %vm533, %v526, %v530
    %v535 = vand.u32 2147483647, %v522
    %vm536 = vcmp.eq.f32.partialorder %v535, 8.507059e+37
    %v537 = vand.u32 %v522, 2147483648
    %v538 = vor.u32 1.1754944e-38, %v537
    %v539 = vsel %vm536, %v538, %v534
    %v540 = vmul.f32 %v517, %v539
    %v541 = vrcp.pop %v525
    %v542 = vmul.f32 %v525, %v541
    %v543 = vsub.f32 1.0, %v542
    %v544 = vmul.f32 %v541, %v543
    %v545 = vadd.f32 %v541, %v544
    %vm546 = vweird.f32 %v525
    %vm547 = vweird.f32 %v541
    %vm548 = vmor %vm546, %vm547
    %v549 = vsel %vm548, %v541, %v545
    %v550 = vand.u32 2147483647, %v525
    %vm551 = vcmp.eq.f32.partialorder %v550, 8.507059e+37
    %v552 = vand.u32 %v525, 2147483648
    %v553 = vor.u32 1.1754944e-38, %v552
    %v554 = vsel %vm551, %v553, %v549
    %v555 = vmul.f32 %v519, %v554
    %556 = vrot.lane.b32.xlu0 %v130, 48
    %v557 = vpop.permute.xlu0 %556
    %v560 = vsel %vm144, %v540, 0
    %562 = vmatpush.msra.mxu0 0.0
    %563 = vmatpush.msra.mxu0 0.0
    %564 = vmatpush.msra.mxu0 0.0
    %565 = vmatpush.msra.mxu0 0.0
    %566 = vmatpush.msra.mxu0 0.0
    %567 = vmatpush.msra.mxu0 0.0
    %568 = vmatpush.msra.mxu0 0.0
    %569 = vmatpush.msra.mxu0 0.0
    %570 = vmatpush.msra.mxu0 0.0
    %571 = vmatpush.msra.mxu0 0.0
    %572 = vmatpush.msra.mxu0 0.0
    %573 = vmatpush.msra.mxu0 0.0
    %574 = vmatpush.msra.mxu0 0.0
    %575 = vmatpush.msra.mxu0 0.0
    %576 = vmatpush.msra.mxu0 0.0
    %577 = vmatpush.msra.mxu0 %v557
    %578 = vmatmul.f32.gmra.mxu0 %v560
    %v579 = vpop.f32.mrf.mxu0
    %v580 = vadd.f32 0.0, %v579
    %581 = vdwg.mxu0
    %582 = vrot.lane.b32.xlu0 %v133, 48
    %v583 = vpop.permute.xlu0 %582
    %v586 = vsel %vm144, %v555, 0
    %588 = vmatpush.msra.mxu0 0.0
    %589 = vmatpush.msra.mxu0 0.0
    %590 = vmatpush.msra.mxu0 0.0
    %591 = vmatpush.msra.mxu0 0.0
    %592 = vmatpush.msra.mxu0 0.0
    %593 = vmatpush.msra.mxu0 0.0
    %594 = vmatpush.msra.mxu0 0.0
    %595 = vmatpush.msra.mxu0 0.0
    %596 = vmatpush.msra.mxu0 0.0
    %597 = vmatpush.msra.mxu0 0.0
    %598 = vmatpush.msra.mxu0 0.0
    %599 = vmatpush.msra.mxu0 0.0
    %600 = vmatpush.msra.mxu0 0.0
    %601 = vmatpush.msra.mxu0 0.0
    %602 = vmatpush.msra.mxu0 0.0
    %603 = vmatpush.msra.mxu0 %v583
    %604 = vmatmul.f32.gmra.mxu0 %v586
    %v605 = vpop.f32.mrf.mxu0
    %v606 = vadd.f32 0.0, %v605
    %607 = vdwg.mxu0
    %608 = vrot.lane.b32.xlu0 %v130, 104
    %v609 = vpop.permute.xlu0 %608
    %610 = vrot.lane.b32.xlu0 %v130, 72
    %v611 = vpop.permute.xlu0 %610
    %v612 = vsel %vm144, %v609, 0
    %v614 = vsel %vm144, %v611, 0
    %616 = vmatpush.xpose.msra.mxu0 0.0
    %617 = vmatpush.xpose.msra.mxu0 0.0
    %618 = vmatpush.xpose.msra.mxu0 0.0
    %619 = vmatpush.xpose.msra.mxu0 0.0
    %620 = vmatpush.xpose.msra.mxu0 0.0
    %621 = vmatpush.xpose.msra.mxu0 0.0
    %622 = vmatpush.xpose.msra.mxu0 0.0
    %623 = vmatpush.xpose.msra.mxu0 0.0
    %624 = vmatpush.xpose.msra.mxu0 0.0
    %625 = vmatpush.xpose.msra.mxu0 0.0
    %626 = vmatpush.xpose.msra.mxu0 0.0
    %627 = vmatpush.xpose.msra.mxu0 0.0
    %628 = vmatpush.xpose.msra.mxu0 0.0
    %629 = vmatpush.xpose.msra.mxu0 0.0
    %630 = vmatpush.xpose.msra.mxu0 0.0
    %631 = vmatpush.xpose.msra.mxu0 %v614
    %632 = vmatmul.f32.gmra.mxu0 %v612
    %v633 = vpop.f32.mrf.mxu0
    %v634 = vadd.f32 %v140, %v633
    %635 = vdwg.mxu0
    %636 = vrot.lane.b32.xlu0 %v133, 104
    %v637 = vpop.permute.xlu0 %636
    %638 = vrot.lane.b32.xlu0 %v133, 72
    %v639 = vpop.permute.xlu0 %638
    %v640 = vsel %vm144, %v637, 0
    %v642 = vsel %vm144, %v639, 0
    %644 = vmatpush.xpose.msra.mxu0 0.0
    %645 = vmatpush.xpose.msra.mxu0 0.0
    %646 = vmatpush.xpose.msra.mxu0 0.0
    %647 = vmatpush.xpose.msra.mxu0 0.0
    %648 = vmatpush.xpose.msra.mxu0 0.0
    %649 = vmatpush.xpose.msra.mxu0 0.0
    %650 = vmatpush.xpose.msra.mxu0 0.0
    %651 = vmatpush.xpose.msra.mxu0 0.0
    %652 = vmatpush.xpose.msra.mxu0 0.0
    %653 = vmatpush.xpose.msra.mxu0 0.0
    %654 = vmatpush.xpose.msra.mxu0 0.0
    %655 = vmatpush.xpose.msra.mxu0 0.0
    %656 = vmatpush.xpose.msra.mxu0 0.0
    %657 = vmatpush.xpose.msra.mxu0 0.0
    %658 = vmatpush.xpose.msra.mxu0 0.0
    %659 = vmatpush.xpose.msra.mxu0 %v642
    %660 = vmatmul.f32.gmra.mxu0 %v640
    %v661 = vpop.f32.mrf.mxu0
    %v662 = vadd.f32 %v140, %v661
    %663 = vdwg.mxu0
    %v664 = vsel %vm144, %v634, -inf
    %665 = vmax.xlane.f32.xlu0 %v664
    %v666 = vpop.xlane.xlu0 %665
    %v667 = vsel %vm144, %v662, -inf
    %668 = vmax.xlane.f32.xlu0 %v667
    %v669 = vpop.xlane.xlu0 %668
    %v670 = vsub.f32 %v634, %v666
    %v671 = vsub.f32 %v662, %v669
    %v672 = vmul.f32 %v670, 1.442695
    %v673 = vpow.pop %v672
    %v674 = vmul.f32 %v671, 1.442695
    %v675 = vpow.pop %v674
    %v676 = vsel %vm144, %v673, 0.0
    %677 = vadd.xlane.f32.xlu0 %v676
    %v678 = vpop.xlane.xlu0 %677
    %v679 = vsel %vm144, %v675, 0.0
    %680 = vadd.xlane.f32.xlu0 %v679
    %v681 = vpop.xlane.xlu0 %680
    %v682 = vrcp.pop %v678
    %v683 = vmul.f32 %v678, %v682
    %v684 = vsub.f32 1.0, %v683
    %v685 = vmul.f32 %v682, %v684
    %v686 = vadd.f32 %v682, %v685
    %vm687 = vweird.f32 %v678
    %vm688 = vweird.f32 %v682
    %vm689 = vmor %vm687, %vm688
    %v690 = vsel %vm689, %v682, %v686
    %v691 = vand.u32 2147483647, %v678
    %vm692 = vcmp.eq.f32.partialorder %v691, 8.507059e+37
    %v693 = vand.u32 %v678, 2147483648
    %v694 = vor.u32 1.1754944e-38, %v693
    %v695 = vsel %vm692, %v694, %v690
    %v696 = vmul.f32 %v673, %v695
    %v697 = vrcp.pop %v681
    %v698 = vmul.f32 %v681, %v697
    %v699 = vsub.f32 1.0, %v698
    %v700 = vmul.f32 %v697, %v699
    %v701 = vadd.f32 %v697, %v700
    %vm702 = vweird.f32 %v681
    %vm703 = vweird.f32 %v697
    %vm704 = vmor %vm702, %vm703
    %v705 = vsel %vm704, %v697, %v701
    %v706 = vand.u32 2147483647, %v681
    %vm707 = vcmp.eq.f32.partialorder %v706, 8.507059e+37
    %v708 = vand.u32 %v681, 2147483648
    %v709 = vor.u32 1.1754944e-38, %v708
    %v710 = vsel %vm707, %v709, %v705
    %v711 = vmul.f32 %v675, %v710
    %712 = vrot.lane.b32.xlu0 %v130, 40
    %v713 = vpop.permute.xlu0 %712
    %v716 = vsel %vm144, %v696, 0
    %718 = vmatpush.msra.mxu0 0.0
    %719 = vmatpush.msra.mxu0 0.0
    %720 = vmatpush.msra.mxu0 0.0
    %721 = vmatpush.msra.mxu0 0.0
    %722 = vmatpush.msra.mxu0 0.0
    %723 = vmatpush.msra.mxu0 0.0
    %724 = vmatpush.msra.mxu0 0.0
    %725 = vmatpush.msra.mxu0 0.0
    %726 = vmatpush.msra.mxu0 0.0
    %727 = vmatpush.msra.mxu0 0.0
    %728 = vmatpush.msra.mxu0 0.0
    %729 = vmatpush.msra.mxu0 0.0
    %730 = vmatpush.msra.mxu0 0.0
    %731 = vmatpush.msra.mxu0 0.0
    %732 = vmatpush.msra.mxu0 0.0
    %733 = vmatpush.msra.mxu0 %v713
    %734 = vmatmul.f32.gmra.mxu0 %v716
    %v735 = vpop.f32.mrf.mxu0
    %v736 = vadd.f32 0.0, %v735
    %737 = vdwg.mxu0
    %738 = vrot.lane.b32.xlu0 %v133, 40
    %v739 = vpop.permute.xlu0 %738
    %v742 = vsel %vm144, %v711, 0
    %744 = vmatpush.msra.mxu0 0.0
    %745 = vmatpush.msra.mxu0 0.0
    %746 = vmatpush.msra.mxu0 0.0
    %747 = vmatpush.msra.mxu0 0.0
    %748 = vmatpush.msra.mxu0 0.0
    %749 = vmatpush.msra.mxu0 0.0
    %750 = vmatpush.msra.mxu0 0.0
    %751 = vmatpush.msra.mxu0 0.0
    %752 = vmatpush.msra.mxu0 0.0
    %753 = vmatpush.msra.mxu0 0.0
    %754 = vmatpush.msra.mxu0 0.0
    %755 = vmatpush.msra.mxu0 0.0
    %756 = vmatpush.msra.mxu0 0.0
    %757 = vmatpush.msra.mxu0 0.0
    %758 = vmatpush.msra.mxu0 0.0
    %759 = vmatpush.msra.mxu0 %v739
    %760 = vmatmul.f32.gmra.mxu0 %v742
    %v761 = vpop.f32.mrf.mxu0
    %v762 = vadd.f32 0.0, %v761
    %763 = vdwg.mxu0
    %766 = vrot.lane.b32.xlu0 %v424, 8
    %v767 = vpop.permute.xlu0 %766
    %768 = vrot.lane.b32.xlu0 %v450, 8
    %v769 = vpop.permute.xlu0 %768
    %774 = vrot.lane.b32.xlu0 %v580, 16
    %v775 = vpop.permute.xlu0 %774
    %776 = vrot.lane.b32.xlu0 %v606, 16
    %v777 = vpop.permute.xlu0 %776
    %782 = vrot.lane.b32.xlu0 %v736, 24
    %v783 = vpop.permute.xlu0 %782
    %784 = vrot.lane.b32.xlu0 %v762, 24
    %v785 = vpop.permute.xlu0 %784
    %v788 = vsel %vm144, %v268, %v767
    %v789 = vsel %vm144, %v294, %v769
    %vm790 = vcmask 130048
    %v791 = vsel %vm790, %v788, %v775
    %v792 = vsel %vm790, %v789, %v777
    %vm793 = vcmask 195584
    %v794 = vsel %vm793, %v791, %v783
    %v795 = vsel %vm793, %v792, %v785
    %v796 = vld [vmem:[%s3] sm:$0xff]
    %v797 = vld [vmem:[%s3 + $0x8] sm:$0xff]
    %v798 = vld [vmem:[%s3 + $0x10] sm:$0xff]
    %v799 = vld [vmem:[%s3 + $0x18] sm:$0xff]
    %v801 = vsel %vm59, %v794, 0
    %v804 = vsel %vm59, %v795, 0
    %806 = vmatpush.msra.mxu0 0.0
    %807 = vmatpush.msra.mxu0 0.0
    %808 = vmatpush.msra.mxu0 0.0
    %809 = vmatpush.msra.mxu0 0.0
    %810 = vmatpush.msra.mxu0 0.0
    %811 = vmatpush.msra.mxu0 0.0
    %812 = vmatpush.msra.mxu0 0.0
    %813 = vmatpush.msra.mxu0 0.0
    %814 = vmatpush.msra.mxu0 0.0
    %815 = vmatpush.msra.mxu0 0.0
    %816 = vmatpush.msra.mxu0 0.0
    %817 = vmatpush.msra.mxu0 0.0
    %818 = vmatpush.msra.mxu0 %v799
    %819 = vmatpush.msra.mxu0 %v798
    %820 = vmatpush.msra.mxu0 %v797
    %821 = vmatpush.msra.mxu0 %v796
    %822 = vmatmul.f32.gmra.mxu0 %v801
    %v823 = vpop.f32.mrf.mxu0
    %v824 = vadd.f32 0.0, %v823
    %825 = vmatmul.f32.gmra.mxu0 %v804
    %v826 = vpop.f32.mrf.mxu0
    %v827 = vadd.f32 0.0, %v826
    %828 = vdwg.mxu0
    %v829 = vadd.f32 %v54, %v824
    %v830 = vadd.f32 %v55, %v827
    %v831 = vld [vmem:[#allocation5 + $0x1] sm:$0x1]
    %v832 = vmul.f32 %v829, %v829
    %v833 = vmul.f32 %v830, %v830
    %v834 = vsel %vm59, %v832, 0.0
    %835 = vadd.xlane.f32.xlu0 %v834
    %v836 = vpop.xlane.xlu0 %835
    %v837 = vsel %vm59, %v833, 0.0
    %838 = vadd.xlane.f32.xlu0 %v837
    %v839 = vpop.xlane.xlu0 %838
    %v840 = vmul.f32 %v836, %v72
    %v841 = vmul.f32 %v839, %v72
    %v842 = vadd.f32 %v840, 1e-06
    %v843 = vadd.f32 %v841, 1e-06
    %v844 = vrsqrt.pop %v842
    %v845 = vmul.f32 %v844, %v842
    %v846 = vmul.f32 %v845, %v844
    %v847 = vmul.f32 0.5, %v846
    %v848 = vsub.f32 1.5, %v847
    %v849 = vmul.f32 %v844, %v848
    %vm850 = vweird.f32 %v842
    %vm851 = vweird.f32 %v844
    %vm852 = vmor %vm850, %vm851
    %v853 = vsel %vm852, %v844, %v849
    %v854 = vrsqrt.pop %v843
    %v855 = vmul.f32 %v854, %v843
    %v856 = vmul.f32 %v855, %v854
    %v857 = vmul.f32 0.5, %v856
    %v858 = vsub.f32 1.5, %v857
    %v859 = vmul.f32 %v854, %v858
    %vm860 = vweird.f32 %v843
    %vm861 = vweird.f32 %v854
    %vm862 = vmor %vm860, %vm861
    %v863 = vsel %vm862, %v854, %v859
    %v864 = vmul.f32 %v829, %v853
    %v865 = vmul.f32 %v830, %v863
    %v866 = vperm.slane %v831, 0
    %v867 = vmul.f32 %v864, %v866
    %v868 = vmul.f32 %v865, %v866
    %v869 = vld [vmem:[#allocation5 + $0x2] sm:$0x1]
    %v870 = vmul.f32 %v867, %v867
    %v871 = vmul.f32 %v868, %v868
    %v872 = vsel %vm59, %v870, 0.0
    %873 = vadd.xlane.f32.xlu0 %v872
    %v874 = vpop.xlane.xlu0 %873
    %v875 = vsel %vm59, %v871, 0.0
    %876 = vadd.xlane.f32.xlu0 %v875
    %v877 = vpop.xlane.xlu0 %876
    %v878 = vmul.f32 %v874, %v72
    %v879 = vmul.f32 %v877, %v72
    %v880 = vadd.f32 %v878, 1e-06
    %v881 = vadd.f32 %v879, 1e-06
    %v882 = vrsqrt.pop %v880
    %v883 = vmul.f32 %v882, %v880
    %v884 = vmul.f32 %v883, %v882
    %v885 = vmul.f32 0.5, %v884
    %v886 = vsub.f32 1.5, %v885
    %v887 = vmul.f32 %v882, %v886
    %vm888 = vweird.f32 %v880
    %vm889 = vweird.f32 %v882
    %vm890 = vmor %vm888, %vm889
    %v891 = vsel %vm890, %v882, %v887
    %v892 = vrsqrt.pop %v881
    %v893 = vmul.f32 %v892, %v881
    %v894 = vmul.f32 %v893, %v892
    %v895 = vmul.f32 0.5, %v894
    %v896 = vsub.f32 1.5, %v895
    %v897 = vmul.f32 %v892, %v896
    %vm898 = vweird.f32 %v881
    %vm899 = vweird.f32 %v892
    %vm900 = vmor %vm898, %vm899
    %v901 = vsel %vm900, %v892, %v897
    %v902 = vmul.f32 %v867, %v891
    %v903 = vmul.f32 %v868, %v901
    %v904 = vperm.slane %v869, 0
    %v905 = vmul.f32 %v902, %v904
    %v906 = vmul.f32 %v903, %v904
    %v907 = vld [vmem:[%s4] sm:$0xff]
    %v908 = vld [vmem:[%s4 + $0x8] sm:$0xff]
    %v909 = vld [vmem:[%s4 + $0x10] sm:$0xff]
    %v910 = vld [vmem:[%s4 + $0x18] sm:$0xff]
    %v912 = vsel %vm59, %v905, 0
    %v915 = vsel %vm59, %v906, 0
    %917 = vmatpush.msra.mxu0 0.0
    %918 = vmatpush.msra.mxu0 0.0
    %919 = vmatpush.msra.mxu0 0.0
    %920 = vmatpush.msra.mxu0 0.0
    %921 = vmatpush.msra.mxu0 0.0
    %922 = vmatpush.msra.mxu0 0.0
    %923 = vmatpush.msra.mxu0 0.0
    %924 = vmatpush.msra.mxu0 0.0
    %925 = vmatpush.msra.mxu0 0.0
    %926 = vmatpush.msra.mxu0 0.0
    %927 = vmatpush.msra.mxu0 0.0
    %928 = vmatpush.msra.mxu0 0.0
    %929 = vmatpush.msra.mxu0 %v910
    %930 = vmatpush.msra.mxu0 %v909
    %931 = vmatpush.msra.mxu0 %v908
    %932 = vmatpush.msra.mxu0 %v907
    %933 = vmatmul.f32.gmra.mxu0 %v912
    %v934 = vpop.f32.mrf.mxu0
    %v935 = vadd.f32 0.0, %v934
    %936 = vmatmul.f32.gmra.mxu0 %v915
    %v937 = vpop.f32.mrf.mxu0
    %v938 = vadd.f32 0.0, %v937
    %939 = vdwg.mxu0
    %v940 = vxor.u32 %v935, 2147483648
    %v941 = vxor.u32 %v938, 2147483648
    %v942 = vmul.f32 %v940, 1.442695
    %v943 = vpow.pop %v942
    %v944 = vmul.f32 %v941, 1.442695
    %v945 = vpow.pop %v944
    %v946 = vadd.f32 %v943, 1.0
    %v947 = vadd.f32 %v945, 1.0
    %v948 = vrcp.pop %v946
    %v949 = vmul.f32 %v946, %v948
    %v950 = vsub.f32 1.0, %v949
    %v951 = vmul.f32 %v948, %v950
    %v952 = vadd.f32 %v948, %v951
    %vm953 = vweird.f32 %v946
    %vm954 = vweird.f32 %v948
    %vm955 = vmor %vm953, %vm954
    %v956 = vsel %vm955, %v948, %v952
    %v957 = vand.u32 2147483647, %v946
    %vm958 = vcmp.eq.f32.partialorder %v957, 8.507059e+37
    %v959 = vand.u32 %v946, 2147483648
    %v960 = vor.u32 1.1754944e-38, %v959
    %v961 = vsel %vm958, %v960, %v956
    %v962 = vmul.f32 1.0, %v961
    %v963 = vrcp.pop %v947
    %v964 = vmul.f32 %v947, %v963
    %v965 = vsub.f32 1.0, %v964
    %v966 = vmul.f32 %v963, %v965
    %v967 = vadd.f32 %v963, %v966
    %vm968 = vweird.f32 %v947
    %vm969 = vweird.f32 %v963
    %vm970 = vmor %vm968, %vm969
    %v971 = vsel %vm970, %v963, %v967
    %v972 = vand.u32 2147483647, %v947
    %vm973 = vcmp.eq.f32.partialorder %v972, 8.507059e+37
    %v974 = vand.u32 %v947, 2147483648
    %v975 = vor.u32 1.1754944e-38, %v974
    %v976 = vsel %vm973, %v975, %v971
    %v977 = vmul.f32 1.0, %v976
    %v978 = vmul.f32 %v935, %v962
    %v979 = vmul.f32 %v938, %v977
    %982 = vrot.lane.b32.xlu0 %v935, 64
    %v983 = vpop.permute.xlu0 %982
    %984 = vrot.lane.b32.xlu0 %v938, 64
    %v985 = vpop.permute.xlu0 %984
    %v988 = vmul.f32 %v978, %v983
    %v989 = vmul.f32 %v979, %v985
    %v990 = vld [vmem:[%s5] sm:$0xff]
    %v991 = vld [vmem:[%s5 + $0x8] sm:$0xff]
    %v992 = vld [vmem:[%s5 + $0x10] sm:$0xff]
    %v993 = vld [vmem:[%s5 + $0x18] sm:$0xff]
    %v994 = vld [vmem:[%s5 + $0x20] sm:$0xff]
    %v995 = vld [vmem:[%s5 + $0x28] sm:$0xff]
    %v996 = vld [vmem:[%s5 + $0x30] sm:$0xff]
    %v997 = vld [vmem:[%s5 + $0x38] sm:$0xff]
    %vm998 = vcmask 523264
    %v1000 = vsel %vm998, %v988, 0
    %v1003 = vsel %vm998, %v989, 0
    %1005 = vmatpush.msra.mxu0 0.0
    %1006 = vmatpush.msra.mxu0 0.0
    %1007 = vmatpush.msra.mxu0 0.0
    %1008 = vmatpush.msra.mxu0 0.0
    %1009 = vmatpush.msra.mxu0 0.0
    %1010 = vmatpush.msra.mxu0 0.0
    %1011 = vmatpush.msra.mxu0 0.0
    %1012 = vmatpush.msra.mxu0 0.0
    %1013 = vmatpush.msra.mxu0 %v997
    %1014 = vmatpush.msra.mxu0 %v996
    %1015 = vmatpush.msra.mxu0 %v995
    %1016 = vmatpush.msra.mxu0 %v994
    %1017 = vmatpush.msra.mxu0 %v993
    %1018 = vmatpush.msra.mxu0 %v992
    %1019 = vmatpush.msra.mxu0 %v991
    %1020 = vmatpush.msra.mxu0 %v990
    %1021 = vmatmul.f32.gmra.mxu0 %v1000
    %v1022 = vpop.f32.mrf.mxu0
    %v1023 = vadd.f32 0.0, %v1022
    %1024 = vmatmul.f32.gmra.mxu0 %v1003
    %v1025 = vpop.f32.mrf.mxu0
    %v1026 = vadd.f32 0.0, %v1025
    %1027 = vdwg.mxu0
    %v1028 = vadd.f32 %v867, %v1023
    %v1029 = vadd.f32 %v868, %v1026
    %v1030 = vld [vmem:[#allocation5 + $0x3] sm:$0x1]
    %v1031 = vmul.f32 %v1028, %v1028
    %v1032 = vmul.f32 %v1029, %v1029
    %v1033 = vsel %vm59, %v1031, 0.0
    %1034 = vadd.xlane.f32.xlu0 %v1033
    %v1035 = vpop.xlane.xlu0 %1034
    %v1036 = vsel %vm59, %v1032, 0.0
    %1037 = vadd.xlane.f32.xlu0 %v1036
    %v1038 = vpop.xlane.xlu0 %1037
    %v1039 = vmul.f32 %v1035, %v72
    %v1040 = vmul.f32 %v1038, %v72
    %v1041 = vadd.f32 %v1039, 1e-06
    %v1042 = vadd.f32 %v1040, 1e-06
    %v1043 = vrsqrt.pop %v1041
    %v1044 = vmul.f32 %v1043, %v1041
    %v1045 = vmul.f32 %v1044, %v1043
    %v1046 = vmul.f32 0.5, %v1045
    %v1047 = vsub.f32 1.5, %v1046
    %v1048 = vmul.f32 %v1043, %v1047
    %vm1049 = vweird.f32 %v1041
    %vm1050 = vweird.f32 %v1043
    %vm1051 = vmor %vm1049, %vm1050
    %v1052 = vsel %vm1051, %v1043, %v1048
    %v1053 = vrsqrt.pop %v1042
    %v1054 = vmul.f32 %v1053, %v1042
    %v1055 = vmul.f32 %v1054, %v1053
    %v1056 = vmul.f32 0.5, %v1055
    %v1057 = vsub.f32 1.5, %v1056
    %v1058 = vmul.f32 %v1053, %v1057
    %vm1059 = vweird.f32 %v1042
    %vm1060 = vweird.f32 %v1053
    %vm1061 = vmor %vm1059, %vm1060
    %v1062 = vsel %vm1061, %v1053, %v1058
    %v1063 = vmul.f32 %v1028, %v1052
    %v1064 = vmul.f32 %v1029, %v1062
    %v1065 = vperm.slane %v1030, 0
    %v1066 = vmul.f32 %v1063, %v1065
    %v1067 = vmul.f32 %v1064, %v1065
    %1068 = vst.msk [vmem:[#allocation7] sm:$0xff] %vm59, %v1066
    %1069 = vst.msk [vmem:[#allocation7 + $0x8] sm:$0xff] %vm59, %v1067
    // Predicated region
    $region34: #{tpu_custom_call.1} parent=1 // pred_check
      _
    $region35: #{tpu_custom_call.1} parent=1 // pred_check_branch
      %1071 = sbr.rel (0) target = $region37
    $region36: #{tpu_custom_call.1} parent=1 // pred_region
      %1073 = vsyncadd [#allocation4], 0
      %s1074 = sshll.u32 [#allocation7], 4
      %s1075 = int_to_ptr.vmem [resolvable:$true] %s1074
      %s1076 = sshll.u32 %s6, 4
      %s1077 = int_to_ptr.hbm [resolvable:$true] %s1076
      %1082 = dma.vmem_to_hbm [thread:$0]  %s1075, 256, %s1077, [#allocation4], 128, 128, 8
    $region37: #{tpu_custom_call.1} parent=1 // pred_fallthru
      _
    // Predicated region
    $region38: #{tpu_custom_call.1} parent=1 // pred_check
      _
    $region39: #{tpu_custom_call.1} parent=1 // pred_check_branch
      %1084 = sbr.rel (0) target = $region41
    $region40: #{tpu_custom_call.1} parent=1 // pred_region
      %1086 = dma.done [#allocation4], 256
    $region41: #{tpu_custom_call.1} parent=1 // pred_fallthru
      _
    %1087 = vsyncpa [#allocation3], 1
    %1088 = vsyncpa [#allocation6], 1
    %1089 = vsyncpa [#allocation4], 1

</llo_original>
